<compile_context>
chip_gen: v5e
topology: v5e:2x2
jax: 0.10.0
libtpu: 0.0.40
codegen_flags: <defaults>
</compile_context>

<pallas_src>
import numpy as np
import jax
import jax.numpy as jnp
from jax.experimental import pallas as pl
from jax.experimental.pallas import tpu as pltpu


# ---------------------------------------------------------------------------
# bior2.2 reconstruction filters (pywt.Wavelet('bior2.2').rec_lo / .rec_hi),
# hard-coded so the script needs no pywt / file access.
# ---------------------------------------------------------------------------
BIOR22_REC_LO = [0.0, 0.35355339059327378637, 0.70710678118654752440,
                 0.35355339059327378637, 0.0, 0.0]
BIOR22_REC_HI = [0.0, 0.17677669529663688110, 0.35355339059327378637,
                 -1.06066017177982128660, 0.35355339059327378637,
                 0.17677669529663688110]


def build_dwt_matrices(H, W, band_low, band_high):
    """Replicates DWT_2D.get_matrix() (matrix_low_0, matrix_low_1,
    matrix_high_0, matrix_high_1) with numpy, deterministically."""
    band_length = len(band_low)
    assert band_length % 2 == 0
    band_length_half = band_length // 2

    L1 = max(H, W)
    L = L1 // 2
    matrix_h = np.zeros((L, L1 + band_length - 2), dtype=np.float64)
    matrix_g = np.zeros((L1 - L, L1 + band_length - 2), dtype=np.float64)
    end = None if band_length_half == 1 else (-band_length_half + 1)

    index = 0
    for i in range(L):
        for j in range(band_length):
            matrix_h[i, index + j] = band_low[j]
        index += 2
    matrix_h_0 = matrix_h[0:H // 2, 0:H + band_length - 2]
    matrix_h_1 = matrix_h[0:W // 2, 0:W + band_length - 2]

    index = 0
    for i in range(L1 - L):
        for j in range(band_length):
            matrix_g[i, index + j] = band_high[j]
        index += 2
    matrix_g_0 = matrix_g[0:H - H // 2, 0:H + band_length - 2]
    matrix_g_1 = matrix_g[0:W - W // 2, 0:W + band_length - 2]

    matrix_h_0 = matrix_h_0[:, band_length_half - 1:end]              # (H//2, H)
    matrix_h_1 = matrix_h_1[:, band_length_half - 1:end].T            # (W, W//2)
    matrix_g_0 = matrix_g_0[:, band_length_half - 1:end]              # (H-H//2, H)
    matrix_g_1 = matrix_g_1[:, band_length_half - 1:end].T            # (W, W-W//2)

    return (matrix_h_0.astype(np.float32), matrix_h_1.astype(np.float32),
            matrix_g_0.astype(np.float32), matrix_g_1.astype(np.float32))


# ---------------------------------------------------------------------------
# Pallas kernel: nb batch elements per grid step, all channels resident so the
# channel softmax is a pure in-kernel reduction over axis=1.
# ---------------------------------------------------------------------------
def wad_kernel(x_ref, w1_ref, w0t_ref, out_ref):
    # x_ref:   (nb, C, H, W)   f32
    # w1_ref:  (W, W)   bf16   [ML1 | MH1]     fused column filters
    # w0t_ref: (H, H)   bf16   [ML0 ; MH0]^T   fused, pre-transposed row filters
    # out_ref: (nb, C, H//2, W//2)
    nb, C, H, W = x_ref.shape
    Hh, Wh = H // 2, W // 2
    B = nb * C

    w1 = w1_ref[...]
    w0t = w0t_ref[...]

    # ---- column transform: ONE big MXU matmul -----------------------------
    # batch * channels * rows folded into M; low/high column bands fused in N.
    xm = x_ref[...].reshape(B * H, W).astype(jnp.bfloat16)
    t = jnp.dot(xm, w1, preferred_element_type=jnp.float32)          # (B*H, W) f32

    # ---- move H into the lane (contraction) dim: minor-dims transpose (XLU)
    tt = jnp.transpose(t.reshape(B, H, W), (0, 2, 1))                # (B, W, H) f32
    ttm = tt.reshape(B * W, H).astype(jnp.bfloat16)

    # ---- row transform: ONE big MXU matmul --------------------------------
    # batch * channels * cols folded into M; low/high row bands fused in N.
    y = jnp.dot(ttm, w0t, preferred_element_type=jnp.float32)        # (B*W, H) f32
    y4 = y.reshape(nb, C, W, H)     # indices (n, c, q[col], r[row]) -- spatially transposed

    # Band slices on the f32 accumulator output: sublane slice at Wh (multiple
    # of 8 for even W >= 16), lane slice at Hh (cheap XLU lane shift).
    llt = y4[:, :, :Wh, :Hh]        # LL^T
    lht = y4[:, :, Wh:, :Hh]        # LH^T
    hlt = y4[:, :, :Wh, Hh:]        # HL^T

    # ---- channel softmax (nn.Softmax2d) as stacked axis-1 reductions ------
    s = lht + hlt
    m = jnp.max(s, axis=1, keepdims=True)
    e = jnp.exp(s - m)
    z = jnp.sum(e, axis=1, keepdims=True)
    att = e * pl.reciprocal(z, approx=True)          # EUP reciprocal (frees VALU)

    # out = LL + LL * softmax_c(LH + HL); undo the spatial transpose on the
    # quarter-size result (minor-dims XLU transpose), then store NCHW.
    out_t = llt * (1.0 + att)                        # (nb, C, Wh, Hh)
    out_ref[...] = jnp.transpose(out_t, (0, 1, 3, 2)).astype(out_ref.dtype)

    # TODO(synk): the PyTorch forward also calls show_tensor() (matplotlib
    # visualization side-effect); it does not affect the returned tensor and
    # has no Pallas equivalent, so it is intentionally omitted.


def wad_module3_forward(x, w1, w0t, *, block_bytes=2 << 20,
                        vmem_limit_bytes=32 * 1024 * 1024):
    N, C, H, W = x.shape
    assert H % 2 == 0 and W % 2 == 0, "bior2.2 DWT path assumes even spatial dims"
    Hh, Wh = H // 2, W // 2

    # Batch block: largest divisor of N whose f32 input slab fits block_bytes,
    # capped at N//2 so the grid always has >= 2 steps (pipelining, and v7x
    # megacore sharding of the "parallel" batch axis).  The 2 MiB default keeps
    # 2x input (double-buffered) + ~4-5x input of live f32/bf16 intermediates
    # + 2x output inside the 32 MiB scoped-VMEM limit requested below on every
    # generation (v7x: 64 MiB physical / 32 MiB default scope; v5e default is
    # only 16 MiB, hence the explicit vmem_limit_bytes).
    per_item = C * H * W * x.dtype.itemsize
    nb = max(1, min(N, block_bytes // max(per_item, 1)))
    nb = min(nb, max(1, N // 2))
    while N % nb:
        nb -= 1

    return pl.pallas_call(
        wad_kernel,
        out_shape=jax.ShapeDtypeStruct((N, C, Hh, Wh), x.dtype),
        grid=(N // nb,),
        in_specs=[
            pl.BlockSpec((nb, C, H, W), lambda n: (n, 0, 0, 0)),
            pl.BlockSpec((W, W), lambda n: (0, 0)),
            pl.BlockSpec((H, H), lambda n: (0, 0)),
        ],
        out_specs=pl.BlockSpec((nb, C, Hh, Wh), lambda n: (n, 0, 0, 0)),
        compiler_params=pltpu.CompilerParams(
            dimension_semantics=("parallel",),
            vmem_limit_bytes=vmem_limit_bytes),
    )(x, w1, w0t)


# ---------------------------------------------------------------------------
# Pure-JAX reference (same math, f32, no Pallas) for a sanity check.
# ---------------------------------------------------------------------------
def reference_forward(x, ml0, ml1, mh0, mh1):
    L = jnp.einsum('rh,nchw->ncrw', ml0, x)
    Hi = jnp.einsum('rh,nchw->ncrw', mh0, x)
    LL = jnp.einsum('ncrw,wq->ncrq', L, ml1)
    LH = jnp.einsum('ncrw,wq->ncrq', L, mh1)
    HL = jnp.einsum('ncrw,wq->ncrq', Hi, ml1)
    x_high = jax.nn.softmax(LH + HL, axis=1)      # Softmax2d -> channel dim
    return LL + LL * x_high


if __name__ == "__main__":
    key = jax.random.PRNGKey(0)
    N, C, H, W = 2, 4, 16, 16
    x = jax.random.normal(key, (N, C, H, W), dtype=jnp.float32)

    ml0_np, ml1_np, mh0_np, mh1_np = build_dwt_matrices(
        H, W, BIOR22_REC_LO, BIOR22_REC_HI)
    # Fused filter banks for the kernel (bf16 MXU operands):
    w1 = jnp.asarray(np.concatenate([ml1_np, mh1_np], axis=1), dtype=jnp.bfloat16)    # (W, W)
    w0t = jnp.asarray(np.concatenate([ml0_np, mh0_np], axis=0).T, dtype=jnp.bfloat16)  # (H, H)

    out = jax.block_until_ready(wad_module3_forward(x, w1, w0t))
    assert out.shape == (N, C, H // 2, W // 2)

    ref = jax.block_until_ready(reference_forward(
        x, jnp.asarray(ml0_np), jnp.asarray(ml1_np),
        jnp.asarray(mh0_np), jnp.asarray(mh1_np)))
    # bf16 MXU operands + EUP approx reciprocal in the softmax denominator ->
    # ~1e-2 level differences vs. the f32 reference are expected.
    assert jnp.allclose(out, ref, atol=3e-2, rtol=6e-2), "mismatch vs reference"

    print("KERNEL_OK")
</pallas_src>

<mosaic_0001>
module attributes {stable_mosaic.version = 11 : i64} {
  func.func @wad_kernel(%arg0: i32, %arg1: memref<1x4x16x16xf32, #tpu.memory_space<vmem>>, %arg2: memref<16x16xbf16, #tpu.memory_space<vmem>>, %arg3: memref<16x16xbf16, #tpu.memory_space<vmem>>, %arg4: memref<1x4x8x8xf32, #tpu.memory_space<vmem>>) attributes {dimension_semantics = [#tpu.dimension_semantics<parallel>], iteration_bounds = array<i64: 2>, scalar_prefetch = 0 : i64, scratch_operands = 0 : i64, tpu.core_type = #tpu.core_type<tc>, window_params = [{transform_indices = @transform_0, window_bounds = array<i64: 1, 4, 16, 16>}, {pipeline_mode = #tpu.pipeline_mode<synchronous>, transform_indices = @transform_1, window_bounds = array<i64: 16, 16>}, {pipeline_mode = #tpu.pipeline_mode<synchronous>, transform_indices = @transform_2, window_bounds = array<i64: 16, 16>}, {transform_indices = @transform_3, window_bounds = array<i64: 1, 4, 8, 8>}]} {
    %c0 = arith.constant 0 : index
    %c0_0 = arith.constant 0 : index
    %0 = vector.load %arg2[%c0, %c0_0] : memref<16x16xbf16, #tpu.memory_space<vmem>>, vector<16x16xbf16>
    %c0_1 = arith.constant 0 : index
    %c0_2 = arith.constant 0 : index
    %1 = vector.load %arg3[%c0_1, %c0_2] : memref<16x16xbf16, #tpu.memory_space<vmem>>, vector<16x16xbf16>
    %c0_3 = arith.constant 0 : index
    %c0_4 = arith.constant 0 : index
    %c0_5 = arith.constant 0 : index
    %c0_6 = arith.constant 0 : index
    %2 = vector.load %arg1[%c0_3, %c0_4, %c0_5, %c0_6] : memref<1x4x16x16xf32, #tpu.memory_space<vmem>>, vector<1x4x16x16xf32>
    %3 = vector.shape_cast %2 : vector<1x4x16x16xf32> to vector<64x16xf32>
    %4 = arith.truncf %3 : vector<64x16xf32> to vector<64x16xbf16>
    %cst = arith.constant dense<0.000000e+00> : vector<64x16xf32>
    %5 = tpu.matmul %4, %0, %cst {dimension_numbers = #tpu.dot_dimension_numbers<[1], [0], [0], [1], [0, 0, 1, 1], [], []>} : vector<64x16xbf16>, vector<16x16xbf16>, vector<64x16xf32> -> vector<64x16xf32>
    %6 = vector.shape_cast %5 : vector<64x16xf32> to vector<4x16x16xf32>
    %7 = tpu.transpose %6, [0, 2, 1] : vector<4x16x16xf32> -> vector<4x16x16xf32>
    %8 = vector.shape_cast %7 : vector<4x16x16xf32> to vector<64x16xf32>
    %9 = arith.truncf %8 : vector<64x16xf32> to vector<64x16xbf16>
    %cst_7 = arith.constant dense<0.000000e+00> : vector<64x16xf32>
    %10 = tpu.matmul %9, %1, %cst_7 {dimension_numbers = #tpu.dot_dimension_numbers<[1], [0], [0], [1], [0, 0, 1, 1], [], []>} : vector<64x16xbf16>, vector<16x16xbf16>, vector<64x16xf32> -> vector<64x16xf32>
    %11 = vector.shape_cast %10 : vector<64x16xf32> to vector<1x4x16x16xf32>
    %12 = vector.extract_strided_slice %11 {offsets = [0, 0, 0, 0], sizes = [1, 4, 8, 8], strides = [1, 1, 1, 1]} : vector<1x4x16x16xf32> to vector<1x4x8x8xf32>
    %13 = vector.extract_strided_slice %11 {offsets = [0, 0, 8, 0], sizes = [1, 4, 8, 8], strides = [1, 1, 1, 1]} : vector<1x4x16x16xf32> to vector<1x4x8x8xf32>
    %14 = vector.extract_strided_slice %11 {offsets = [0, 0, 0, 8], sizes = [1, 4, 8, 8], strides = [1, 1, 1, 1]} : vector<1x4x16x16xf32> to vector<1x4x8x8xf32>
    %15 = arith.addf %13, %14 : vector<1x4x8x8xf32>
    %cst_8 = arith.constant dense<0xFF800000> : vector<1x8x8xf32>
    %16 = vector.multi_reduction <maximumf>, %15, %cst_8 [1] : vector<1x4x8x8xf32> to vector<1x8x8xf32>
    %17 = vector.shape_cast %16 : vector<1x8x8xf32> to vector<1x1x8x8xf32>
    %18 = vector.broadcast %17 : vector<1x1x8x8xf32> to vector<1x4x8x8xf32>
    %19 = arith.subf %15, %18 : vector<1x4x8x8xf32>
    %20 = math.exp %19 : vector<1x4x8x8xf32>
    %cst_9 = arith.constant dense<0.000000e+00> : vector<1x8x8xf32>
    %21 = vector.multi_reduction <add>, %20, %cst_9 [1] : vector<1x4x8x8xf32> to vector<1x8x8xf32>
    %22 = vector.shape_cast %21 : vector<1x8x8xf32> to vector<1x1x8x8xf32>
    %23 = tpu.reciprocal %22 {approx = true} : vector<1x1x8x8xf32> -> vector<1x1x8x8xf32>
    %24 = vector.broadcast %23 : vector<1x1x8x8xf32> to vector<1x4x8x8xf32>
    %25 = arith.mulf %20, %24 : vector<1x4x8x8xf32>
    %cst_10 = arith.constant 1.000000e+00 : f32
    %26 = vector.broadcast %cst_10 : f32 to vector<1x4x8x8xf32>
    %27 = arith.addf %26, %25 : vector<1x4x8x8xf32>
    %28 = arith.mulf %12, %27 : vector<1x4x8x8xf32>
    %29 = tpu.transpose %28, [0, 1, 3, 2] : vector<1x4x8x8xf32> -> vector<1x4x8x8xf32>
    %c0_11 = arith.constant 0 : index
    %c0_12 = arith.constant 0 : index
    %c0_13 = arith.constant 0 : index
    %c0_14 = arith.constant 0 : index
    %30 = vector.load %arg4[%c0_11, %c0_12, %c0_13, %c0_14] : memref<1x4x8x8xf32, #tpu.memory_space<vmem>>, vector<1x4x8x8xf32>
    tpu.vector_store %arg4[%c0_11, %c0_12, %c0_13, %c0_14], %29 {strides = array<i32>} : memref<1x4x8x8xf32, #tpu.memory_space<vmem>>, vector<1x4x8x8xf32>,
    return
  }
  func.func @transform_0(%arg0: i32) -> (i32, i32, i32, i32) {
    %c0_i32 = arith.constant 0 : i32
    %c0_i32_0 = arith.constant 0 : i32
    %c0_i32_1 = arith.constant 0 : i32
    %c0_i32_2 = arith.constant 0 : i32
    return %arg0, %c0_i32, %c0_i32_0, %c0_i32_1 : i32, i32, i32, i32
  }
  func.func @transform_1(%arg0: i32) -> (i32, i32) {
    %c0_i32 = arith.constant 0 : i32
    %c0_i32_0 = arith.constant 0 : i32
    %c0_i32_1 = arith.constant 0 : i32
    return %c0_i32, %c0_i32_0 : i32, i32
  }
  func.func @transform_2(%arg0: i32) -> (i32, i32) {
    %c0_i32 = arith.constant 0 : i32
    %c0_i32_0 = arith.constant 0 : i32
    %c0_i32_1 = arith.constant 0 : i32
    return %c0_i32, %c0_i32_0 : i32, i32
  }
  func.func @transform_3(%arg0: i32) -> (i32, i32, i32, i32) {
    %c0_i32 = arith.constant 0 : i32
    %c0_i32_0 = arith.constant 0 : i32
    %c0_i32_1 = arith.constant 0 : i32
    %c0_i32_2 = arith.constant 0 : i32
    return %arg0, %c0_i32, %c0_i32_0, %c0_i32_1 : i32, i32, i32, i32
  }
}

</mosaic_0001>

<llo_original>
// kernel: tpu_custom_call.1
$region0: #{tpu_custom_call.1}
  #allocation0 [shape = 'u32[]', space=smem, size = 0x4, offset = 0x4, fixed_abs, tag = 'smem constant byte address 0x4 - core index']
  #allocation1 [shape = 'u32[72,128]{1,0:T(1,128)}', space=vmem, size = 0x9000, scoped, tag = 'internal scratch']
  %s0 = inlined_call_operand.hbm [shape: f32[2,4,16,16], index: 0, kind: input, shape index: {}]
  %s1 = inlined_call_operand.hbm [shape: bf16[16,16], index: 1, kind: input, shape index: {}]
  %s2 = inlined_call_operand.hbm [shape: bf16[16,16], index: 2, kind: input, shape index: {}]
  %s3 = inlined_call_operand.hbm [shape: f32[2,4,8,8], index: 3, kind: output, shape index: {}]
  %s4 = sld [smem:[#allocation0]]
  $region57: #{tpu_custom_call.1} parent=0
    _
  %s6 = ssub.s32 1, %s4
  %s7 = scalar_select 0, %s6, %s4
  $region1: #{tpu_custom_call.1} parent=0
    #allocation2 [shape = 'u8[65536]{0}', space=vmem, size = 0x10000, scoped, tag = 'input window, operand 0']
    #allocation3 [shape = 's32[2]{0}', space=sflag, size = 0x8, scoped, tag = 'scoped memory for tpu_custom_call.1']
    #allocation4 [shape = 's32[2]{0}', space=sflag, size = 0x8, scoped, tag = 'scoped memory for tpu_custom_call.1']
    #allocation5 [shape = 'u8[4096]{0}', space=vmem, size = 0x1000, scoped, tag = 'input window, operand 1, single buffered']
    #allocation6 [shape = 's32[1]{0}', space=sflag, size = 0x4, scoped, tag = 'scoped memory for tpu_custom_call.1']
    #allocation7 [shape = 'u8[4096]{0}', space=vmem, size = 0x1000, scoped, tag = 'input window, operand 2, single buffered']
    #allocation8 [shape = 'u8[32768]{0}', space=vmem, size = 0x8000, scoped, tag = 'output window, operand 0']
    %8 = vsyncpa [#allocation3], 0
    %s9 = scalar_lea.sflag [#allocation3], 1
    %10 = vsyncpa %s9, 0
    %11 = vsyncpa [#allocation6], 0
    %12 = vsyncpa [#allocation4], 0
    %s13 = scalar_lea.sflag [#allocation4], 1
    %14 = vsyncpa %s13, 0
    loop: start=0, step=1, limit=4
    $region2: #{tpu_custom_call.1} parent=1 // loop_pre_header
      _
    $region3: #{tpu_custom_call.1} parent=1 // loop_header
      %s16 = sphi 0, %s20
      %p17 = scmp.ge.s32.totalorder %s16, 4
      %s26 = sphi 0, %s28
      %s29 = sphi 0, %s26
      %s30 = sphi 0, %s29
      %s46 = sphi 0, %s30
      %s50 = sphi 0, %s50
      %s52 = sphi 0, %s50
      %s53 = sphi 0, %s52
      %s67 = sphi 0, %s53
      %s71 = sphi 0, %s71
      %s73 = sphi 0, %s71
      %s74 = sphi 0, %s73
      %s88 = sphi 0, %s74
      %s94 = sphi 0, %s96
      %s97 = sphi 0, %s94
      %s98 = sphi 0, %s97
      %s114 = sphi 0, %s98
    $region4: #{tpu_custom_call.1} parent=1 // loop_header_branch
      %19 = sbr.rel (%p17) target = $region8
    $region5: #{tpu_custom_call.1} parent=1 // loop_body
      %s21 = ssub.s32 %s16, 1
      %s22 = ssub.s32 %s16, 2
      %s23 = sadd.s32 %s16, 1
      %s24 = ssub.s32 %s16, %s23
      %p25 = scmp.eq.s32.totalorder %s24, 0
      %s27 = sadd.s32 %s26, 1
      %s28 = scalar_select %p25, %s26, %s27
      %p31 = pneg %p25
      %p32 = scmp.eq.s32.totalorder %s16, 1
      %p33 = por %p31, %p32
      %p34 = scmp.ne.s32.totalorder %s26, %s29
      %p35 = scmp.eq.s32.totalorder %s16, 0
      %p36 = por %p34, %p35
      %p37 = scmp.ne.s32.totalorder %s26, %s29
      %p38 = scmp.eq.s32.totalorder %s21, 1
      %p39 = por %p37, %p38
      %p40 = scmp.ne.s32.totalorder %s29, %s30
      %p41 = scmp.eq.s32.totalorder %s21, 0
      %p42 = por %p40, %p41
      %p43 = scmp.ne.s32.totalorder %s29, %s30
      %p44 = scmp.eq.s32.totalorder %s22, 1
      %p45 = por %p43, %p44
      %p47 = scmp.ne.s32.totalorder %s30, %s46
      %p48 = scmp.eq.s32.totalorder %s22, 0
      %p49 = por %p47, %p48
      %s51 = sadd.s32 %s50, 1
      %p54 = scmp.eq.s32.totalorder %s16, 1
      %p55 = scmp.ne.s32.totalorder %s50, %s52
      %p56 = scmp.eq.s32.totalorder %s16, 0
      %p57 = por %p55, %p56
      %p58 = scmp.ne.s32.totalorder %s50, %s52
      %p59 = scmp.eq.s32.totalorder %s21, 1
      %p60 = por %p58, %p59
      %p61 = scmp.ne.s32.totalorder %s52, %s53
      %p62 = scmp.eq.s32.totalorder %s21, 0
      %p63 = por %p61, %p62
      %p64 = scmp.ne.s32.totalorder %s52, %s53
      %p65 = scmp.eq.s32.totalorder %s22, 1
      %p66 = por %p64, %p65
      %p68 = scmp.ne.s32.totalorder %s53, %s67
      %p69 = scmp.eq.s32.totalorder %s22, 0
      %p70 = por %p68, %p69
      %s72 = sadd.s32 %s71, 1
      %p75 = scmp.eq.s32.totalorder %s16, 1
      %p76 = scmp.ne.s32.totalorder %s71, %s73
      %p77 = scmp.eq.s32.totalorder %s16, 0
      %p78 = por %p76, %p77
      %p79 = scmp.ne.s32.totalorder %s71, %s73
      %p80 = scmp.eq.s32.totalorder %s21, 1
      %p81 = por %p79, %p80
      %p82 = scmp.ne.s32.totalorder %s73, %s74
      %p83 = scmp.eq.s32.totalorder %s21, 0
      %p84 = por %p82, %p83
      %p85 = scmp.ne.s32.totalorder %s73, %s74
      %p86 = scmp.eq.s32.totalorder %s22, 1
      %p87 = por %p85, %p86
      %p89 = scmp.ne.s32.totalorder %s74, %s88
      %p90 = scmp.eq.s32.totalorder %s22, 0
      %p91 = por %p89, %p90
      %s92 = ssub.s32 %s16, %s23
      %p93 = scmp.eq.s32.totalorder %s92, 0
      %s95 = sadd.s32 %s94, 1
      %s96 = scalar_select %p93, %s94, %s95
      %p99 = pneg %p93
      %p100 = scmp.eq.s32.totalorder %s16, 1
      %p101 = por %p99, %p100
      %p102 = scmp.ne.s32.totalorder %s94, %s97
      %p103 = scmp.eq.s32.totalorder %s16, 0
      %p104 = por %p102, %p103
      %p105 = scmp.ne.s32.totalorder %s94, %s97
      %p106 = scmp.eq.s32.totalorder %s21, 1
      %p107 = por %p105, %p106
      %p108 = scmp.ne.s32.totalorder %s97, %s98
      %p109 = scmp.eq.s32.totalorder %s21, 0
      %p110 = por %p108, %p109
      %p111 = scmp.ne.s32.totalorder %s97, %s98
      %p112 = scmp.eq.s32.totalorder %s22, 1
      %p113 = por %p111, %p112
      %p115 = scmp.ne.s32.totalorder %s98, %s114
      %p116 = scmp.eq.s32.totalorder %s22, 0
      %p117 = por %p115, %p116
      %p118 = scmp.le.s32.totalorder 1, %s16
      %p119 = scmp.lt.s32.totalorder %s16, 3
      %p120 = pnand %p118, %p119
      %p121 = pneg %p120
      // Predicated region
      $region9: #{tpu_custom_call.1} parent=5 // pred_check
        _
      $region10: #{tpu_custom_call.1} parent=5 // pred_check_branch
        %123 = sbr.rel (%p120) target = $region12
      $region11: #{tpu_custom_call.1} parent=5 // pred_region
        %s124 = ssub.s32 %s16, 1
        // Predicated region
        $region13: #{tpu_custom_call.1} parent=11 // pred_check
          %p125 = pneg %p63
        $region14: #{tpu_custom_call.1} parent=11 // pred_check_branch
          %127 = sbr.rel (%p125) target = $region16
        $region15: #{tpu_custom_call.1} parent=11 // pred_region
          %129 = vsyncadd [#allocation6], 0
          %s130 = sshll.u32 %s1, 4
          %s131 = int_to_ptr.hbm [resolvable:$true] %s130
          %s132 = sshll.u32 [#allocation5], 4
          %s133 = int_to_ptr.vmem [resolvable:$true] %s132
          %138 = dma.hbm_to_vmem [thread:$0]  %s131, 128, %s133, [#allocation6], 64, 64, 4
        $region16: #{tpu_custom_call.1} parent=11 // pred_fallthru
          _
        // Predicated region
        $region17: #{tpu_custom_call.1} parent=11 // pred_check
          %p139 = pneg %p84
        $region18: #{tpu_custom_call.1} parent=11 // pred_check_branch
          %141 = sbr.rel (%p139) target = $region20
        $region19: #{tpu_custom_call.1} parent=11 // pred_region
          %143 = vsyncadd [#allocation6], 0
          %s144 = sshll.u32 %s2, 4
          %s145 = int_to_ptr.hbm [resolvable:$true] %s144
          %s146 = sshll.u32 [#allocation7], 4
          %s147 = int_to_ptr.vmem [resolvable:$true] %s146
          %152 = dma.hbm_to_vmem [thread:$0]  %s145, 128, %s147, [#allocation6], 64, 64, 4
        $region20: #{tpu_custom_call.1} parent=11 // pred_fallthru
          _
      $region12: #{tpu_custom_call.1} parent=5 // pred_fallthru
        _
      %p153 = scmp.lt.s32.totalorder %s16, 2
      // Predicated region
      $region21: #{tpu_custom_call.1} parent=5 // pred_check
        %p154 = pneg %p153
      $region22: #{tpu_custom_call.1} parent=5 // pred_check_branch
        %156 = sbr.rel (%p154) target = $region24
      $region23: #{tpu_custom_call.1} parent=5 // pred_region
        // Predicated region
        $region25: #{tpu_custom_call.1} parent=23 // pred_check
          %p157 = pneg %p36
        $region26: #{tpu_custom_call.1} parent=23 // pred_check_branch
          %159 = sbr.rel (%p157) target = $region28
        $region27: #{tpu_custom_call.1} parent=23 // pred_region
          %s160 = sand.u32 %s26, 1
          %s161 = scalar_lea.sflag [#allocation3], %s160
          %s162 = sand.u32 %s26, 1
          %s163 = smul.addr %s162, 64
          %s164 = scalar_lea.vmem [#allocation2], %s163
          %166 = vsyncadd %s161, 0
          %s167 = smul.addr %s16, 8
          %s168 = smul.addr %s167, 8
          %s169 = scalar_lea.hbm %s0, %s168
          %s170 = sshll.u32 %s169, 4
          %s171 = int_to_ptr.hbm [resolvable:$true] %s170
          %s172 = sshll.u32 %s164, 4
          %s173 = int_to_ptr.vmem [resolvable:$true] %s172
          %178 = dma.hbm_to_vmem [thread:$0]  %s171, 1024, %s173, %s161, 128, 128, 8
        $region28: #{tpu_custom_call.1} parent=23 // pred_fallthru
          _
      $region24: #{tpu_custom_call.1} parent=5 // pred_fallthru
        _
      %p179 = scmp.le.s32.totalorder 1, %s16
      %p180 = scmp.lt.s32.totalorder %s16, 3
      %p181 = pnand %p179, %p180
      %p182 = pneg %p181
      // Predicated region
      $region29: #{tpu_custom_call.1} parent=5 // pred_check
        _
      $region30: #{tpu_custom_call.1} parent=5 // pred_check_branch
        %184 = sbr.rel (%p181) target = $region32
      $region31: #{tpu_custom_call.1} parent=5 // pred_region
        %s185 = ssub.s32 %s16, 1
        %s186 = sand.u32 %s29, 1
        %s187 = scalar_lea.sflag [#allocation3], %s186
        %s188 = sand.u32 %s29, 1
        %s189 = smul.addr %s188, 64
        %s190 = scalar_lea.vmem [#allocation2], %s189
        // Predicated region
        $region33: #{tpu_custom_call.1} parent=31 // pred_check
          %p191 = pneg %p42
        $region34: #{tpu_custom_call.1} parent=31 // pred_check_branch
          %193 = sbr.rel (%p191) target = $region36
        $region35: #{tpu_custom_call.1} parent=31 // pred_region
          %195 = dma.done %s187, 1024
        $region36: #{tpu_custom_call.1} parent=31 // pred_fallthru
          _
        // Predicated region
        $region37: #{tpu_custom_call.1} parent=31 // pred_check
          %p196 = pneg %p63
        $region38: #{tpu_custom_call.1} parent=31 // pred_check_branch
          %198 = sbr.rel (%p196) target = $region40
        $region39: #{tpu_custom_call.1} parent=31 // pred_region
          %200 = dma.done [#allocation6], 128
        $region40: #{tpu_custom_call.1} parent=31 // pred_fallthru
          _
        // Predicated region
        $region41: #{tpu_custom_call.1} parent=31 // pred_check
          %p201 = pneg %p84
        $region42: #{tpu_custom_call.1} parent=31 // pred_check_branch
          %203 = sbr.rel (%p201) target = $region44
        $region43: #{tpu_custom_call.1} parent=31 // pred_region
          %205 = dma.done [#allocation6], 128
        $region44: #{tpu_custom_call.1} parent=31 // pred_fallthru
          _
        %s206 = sand.u32 %s29, 1
        %s207 = scalar_lea.sflag [#allocation3], %s206
        %s208 = sand.u32 %s29, 1
        %s209 = smul.addr %s208, 64
        %s210 = scalar_lea.vmem [#allocation2], %s209
        %p211 = pneg %p42
        %p212 = pneg %p39
        %p213 = pneg %p63
        %p214 = pneg %p60
        %p215 = pneg %p84
        %p216 = pneg %p81
        %p217 = pneg %p110
        %p218 = pneg %p107
        %s219 = sand.u32 %s97, 1
        %s220 = scalar_lea.sflag [#allocation4], %s219
        %s221 = sand.u32 %s97, 1
        %s222 = smul.addr %s221, 32
        %s223 = scalar_lea.vmem [#allocation8], %s222
        %v225 = vld [vmem:[#allocation5] sm:$0xf]
        %v226 = vld [vmem:[#allocation5 + $0x4] sm:$0xf]
        %v227 = vld [vmem:[#allocation7] sm:$0xf]
        %v228 = vld [vmem:[#allocation7 + $0x4] sm:$0xf]
        %v229 = vld [vmem:[%s190] sm:$0xff]
        %v230 = vld [vmem:[%s190 + $0x8] sm:$0xff]
        %v231 = vld [vmem:[%s190 + $0x10] sm:$0xff]
        %v232 = vld [vmem:[%s190 + $0x18] sm:$0xff]
        %v233 = vld [vmem:[%s190 + $0x20] sm:$0xff]
        %v234 = vld [vmem:[%s190 + $0x28] sm:$0xff]
        %v235 = vld [vmem:[%s190 + $0x30] sm:$0xff]
        %v236 = vld [vmem:[%s190 + $0x38] sm:$0xff]
        %v237 = vpack.c.bf16 %v230, %v229
        %v238 = vpack.c.bf16 %v232, %v231
        %v239 = vpack.c.bf16 %v234, %v233
        %v240 = vpack.c.bf16 %v236, %v235
        %v243 = vunpack.c.l.b16 %v225
        %v244 = vunpack.c.l.b16 %v226
        %v245 = vpack.c.b16 %v244, %v243
        %vm247 = vcmask 130048
        %v249 = vsel %vm247, %v237, 0
        %v252 = vsel %vm247, %v238, 0
        %v255 = vsel %vm247, %v239, 0
        %v258 = vsel %vm247, %v240, 0
        %260 = vmatpush.bf16.msra.mxu0 0
        %261 = vmatpush.bf16.msra.mxu0 0
        %262 = vmatpush.bf16.msra.mxu0 0
        %263 = vmatpush.bf16.msra.mxu0 0
        %264 = vmatpush.bf16.msra.mxu0 0
        %265 = vmatpush.bf16.msra.mxu0 0
        %266 = vmatpush.bf16.msra.mxu0 0
        %267 = vmatpush.bf16.msra.mxu0 %v245
        %268 = vmatmul.bf16.gmra.mxu0 %v249
        %v269 = vpop.f32.mrf.mxu0
        %v270 = vadd.f32 0.0, %v269
        %v271 = vpop.f32.mrf.mxu0
        %v272 = vadd.f32 0.0, %v271
        %273 = vmatmul.bf16.gmra.mxu0 %v252
        %v274 = vpop.f32.mrf.mxu0
        %v275 = vadd.f32 0.0, %v274
        %v276 = vpop.f32.mrf.mxu0
        %v277 = vadd.f32 0.0, %v276
        %278 = vmatmul.bf16.gmra.mxu0 %v255
        %v279 = vpop.f32.mrf.mxu0
        %v280 = vadd.f32 0.0, %v279
        %v281 = vpop.f32.mrf.mxu0
        %v282 = vadd.f32 0.0, %v281
        %283 = vmatmul.bf16.gmra.mxu0 %v258
        %v284 = vpop.f32.mrf.mxu0
        %v285 = vadd.f32 0.0, %v284
        %v286 = vpop.f32.mrf.mxu0
        %v287 = vadd.f32 0.0, %v286
        %288 = vdwg.mxu0
        %289 = vxpose.xlu0.b32.start [1/16] %v270, 128
        %290 = vxpose.xlu0.b32.cont [2/16] %v272, 128
        %291 = vxpose.xlu0.b32.cont [3/16] 0.0, 128
        %292 = vxpose.xlu0.b32.cont [4/16] 0.0, 128
        %293 = vxpose.xlu0.b32.cont [5/16] 0.0, 128
        %294 = vxpose.xlu0.b32.cont [6/16] 0.0, 128
        %295 = vxpose.xlu0.b32.cont [7/16] 0.0, 128
        %296 = vxpose.xlu0.b32.cont [8/16] 0.0, 128
        %297 = vxpose.xlu0.b32.cont [9/16] 0.0, 128
        %298 = vxpose.xlu0.b32.cont [10/16] 0.0, 128
        %299 = vxpose.xlu0.b32.cont [11/16] 0.0, 128
        %300 = vxpose.xlu0.b32.cont [12/16] 0.0, 128
        %301 = vxpose.xlu0.b32.cont [13/16] 0.0, 128
        %302 = vxpose.xlu0.b32.cont [14/16] 0.0, 128
        %303 = vxpose.xlu0.b32.cont [15/16] 0.0, 128
        %304 = vxpose.xlu0.b32.end [16/16] 0.0, 128
        %v305 = vpop.trf.xlu0
        %v306 = vpop.trf.xlu0
        %v307 = vpop.trf.xlu0
        %v308 = vpop.trf.xlu0
        %v309 = vpop.trf.xlu0
        %v310 = vpop.trf.xlu0
        %v311 = vpop.trf.xlu0
        %v312 = vpop.trf.xlu0
        %v313 = vpop.trf.xlu0
        %v314 = vpop.trf.xlu0
        %v315 = vpop.trf.xlu0
        %v316 = vpop.trf.xlu0
        %v317 = vpop.trf.xlu0
        %v318 = vpop.trf.xlu0
        %v319 = vpop.trf.xlu0
        %v320 = vpop.trf.xlu0
        %321 = vxpose.xlu0.b32.start [1/16] %v275, 128
        %322 = vxpose.xlu0.b32.cont [2/16] %v277, 128
        %323 = vxpose.xlu0.b32.cont [3/16] 0.0, 128
        %324 = vxpose.xlu0.b32.cont [4/16] 0.0, 128
        %325 = vxpose.xlu0.b32.cont [5/16] 0.0, 128
        %326 = vxpose.xlu0.b32.cont [6/16] 0.0, 128
        %327 = vxpose.xlu0.b32.cont [7/16] 0.0, 128
        %328 = vxpose.xlu0.b32.cont [8/16] 0.0, 128
        %329 = vxpose.xlu0.b32.cont [9/16] 0.0, 128
        %330 = vxpose.xlu0.b32.cont [10/16] 0.0, 128
        %331 = vxpose.xlu0.b32.cont [11/16] 0.0, 128
        %332 = vxpose.xlu0.b32.cont [12/16] 0.0, 128
        %333 = vxpose.xlu0.b32.cont [13/16] 0.0, 128
        %334 = vxpose.xlu0.b32.cont [14/16] 0.0, 128
        %335 = vxpose.xlu0.b32.cont [15/16] 0.0, 128
        %336 = vxpose.xlu0.b32.end [16/16] 0.0, 128
        %v337 = vpop.trf.xlu0
        %v338 = vpop.trf.xlu0
        %v339 = vpop.trf.xlu0
        %v340 = vpop.trf.xlu0
        %v341 = vpop.trf.xlu0
        %v342 = vpop.trf.xlu0
        %v343 = vpop.trf.xlu0
        %v344 = vpop.trf.xlu0
        %v345 = vpop.trf.xlu0
        %v346 = vpop.trf.xlu0
        %v347 = vpop.trf.xlu0
        %v348 = vpop.trf.xlu0
        %v349 = vpop.trf.xlu0
        %v350 = vpop.trf.xlu0
        %v351 = vpop.trf.xlu0
        %v352 = vpop.trf.xlu0
        %353 = vxpose.xlu0.b32.start [1/16] %v280, 128
        %354 = vxpose.xlu0.b32.cont [2/16] %v282, 128
        %355 = vxpose.xlu0.b32.cont [3/16] 0.0, 128
        %356 = vxpose.xlu0.b32.cont [4/16] 0.0, 128
        %357 = vxpose.xlu0.b32.cont [5/16] 0.0, 128
        %358 = vxpose.xlu0.b32.cont [6/16] 0.0, 128
        %359 = vxpose.xlu0.b32.cont [7/16] 0.0, 128
        %360 = vxpose.xlu0.b32.cont [8/16] 0.0, 128
        %361 = vxpose.xlu0.b32.cont [9/16] 0.0, 128
        %362 = vxpose.xlu0.b32.cont [10/16] 0.0, 128
        %363 = vxpose.xlu0.b32.cont [11/16] 0.0, 128
        %364 = vxpose.xlu0.b32.cont [12/16] 0.0, 128
        %365 = vxpose.xlu0.b32.cont [13/16] 0.0, 128
        %366 = vxpose.xlu0.b32.cont [14/16] 0.0, 128
        %367 = vxpose.xlu0.b32.cont [15/16] 0.0, 128
        %368 = vxpose.xlu0.b32.end [16/16] 0.0, 128
        %v369 = vpop.trf.xlu0
        %v370 = vpop.trf.xlu0
        %v371 = vpop.trf.xlu0
        %v372 = vpop.trf.xlu0
        %v373 = vpop.trf.xlu0
        %v374 = vpop.trf.xlu0
        %v375 = vpop.trf.xlu0
        %v376 = vpop.trf.xlu0
        %v377 = vpop.trf.xlu0
        %v378 = vpop.trf.xlu0
        %v379 = vpop.trf.xlu0
        %v380 = vpop.trf.xlu0
        %v381 = vpop.trf.xlu0
        %v382 = vpop.trf.xlu0
        %v383 = vpop.trf.xlu0
        %v384 = vpop.trf.xlu0
        %385 = vxpose.xlu0.b32.start [1/16] %v285, 128
        %386 = vxpose.xlu0.b32.cont [2/16] %v287, 128
        %387 = vxpose.xlu0.b32.cont [3/16] 0.0, 128
        %388 = vxpose.xlu0.b32.cont [4/16] 0.0, 128
        %389 = vxpose.xlu0.b32.cont [5/16] 0.0, 128
        %390 = vxpose.xlu0.b32.cont [6/16] 0.0, 128
        %391 = vxpose.xlu0.b32.cont [7/16] 0.0, 128
        %392 = vxpose.xlu0.b32.cont [8/16] 0.0, 128
        %393 = vxpose.xlu0.b32.cont [9/16] 0.0, 128
        %394 = vxpose.xlu0.b32.cont [10/16] 0.0, 128
        %395 = vxpose.xlu0.b32.cont [11/16] 0.0, 128
        %396 = vxpose.xlu0.b32.cont [12/16] 0.0, 128
        %397 = vxpose.xlu0.b32.cont [13/16] 0.0, 128
        %398 = vxpose.xlu0.b32.cont [14/16] 0.0, 128
        %399 = vxpose.xlu0.b32.cont [15/16] 0.0, 128
        %400 = vxpose.xlu0.b32.end [16/16] 0.0, 128
        %v401 = vpop.trf.xlu0
        %v402 = vpop.trf.xlu0
        %v403 = vpop.trf.xlu0
        %v404 = vpop.trf.xlu0
        %v405 = vpop.trf.xlu0
        %v406 = vpop.trf.xlu0
        %v407 = vpop.trf.xlu0
        %v408 = vpop.trf.xlu0
        %v409 = vpop.trf.xlu0
        %v410 = vpop.trf.xlu0
        %v411 = vpop.trf.xlu0
        %v412 = vpop.trf.xlu0
        %v413 = vpop.trf.xlu0
        %v414 = vpop.trf.xlu0
        %v415 = vpop.trf.xlu0
        %v416 = vpop.trf.xlu0
        %v417 = vpack.c.bf16 %v306, %v305
        %v418 = vpack.c.bf16 %v338, %v337
        %v419 = vpack.c.bf16 %v370, %v369
        %v420 = vpack.c.bf16 %v402, %v401
        %v423 = vunpack.c.l.b16 %v227
        %v424 = vunpack.c.l.b16 %v228
        %v425 = vpack.c.b16 %v424, %v423
        %v428 = vsel %vm247, %v417, 0
        %v431 = vsel %vm247, %v418, 0
        %v434 = vsel %vm247, %v419, 0
        %v437 = vsel %vm247, %v420, 0
        %439 = vmatpush.bf16.msra.mxu0 0
        %440 = vmatpush.bf16.msra.mxu0 0
        %441 = vmatpush.bf16.msra.mxu0 0
        %442 = vmatpush.bf16.msra.mxu0 0
        %443 = vmatpush.bf16.msra.mxu0 0
        %444 = vmatpush.bf16.msra.mxu0 0
        %445 = vmatpush.bf16.msra.mxu0 0
        %446 = vmatpush.bf16.msra.mxu0 %v425
        %447 = vmatmul.bf16.gmra.mxu0 %v428
        %v448 = vpop.f32.mrf.mxu0
        %v449 = vadd.f32 0.0, %v448
        %v450 = vpop.f32.mrf.mxu0
        %v451 = vadd.f32 0.0, %v450
        %452 = vmatmul.bf16.gmra.mxu0 %v431
        %v453 = vpop.f32.mrf.mxu0
        %v454 = vadd.f32 0.0, %v453
        %v455 = vpop.f32.mrf.mxu0
        %v456 = vadd.f32 0.0, %v455
        %457 = vmatmul.bf16.gmra.mxu0 %v434
        %v458 = vpop.f32.mrf.mxu0
        %v459 = vadd.f32 0.0, %v458
        %v460 = vpop.f32.mrf.mxu0
        %v461 = vadd.f32 0.0, %v460
        %462 = vmatmul.bf16.gmra.mxu0 %v437
        %v463 = vpop.f32.mrf.mxu0
        %v464 = vadd.f32 0.0, %v463
        %v465 = vpop.f32.mrf.mxu0
        %v466 = vadd.f32 0.0, %v465
        %467 = vdwg.mxu0
        %472 = vrot.lane.b32.xlu0 %v449, 120
        %v473 = vpop.permute.xlu0 %472
        %474 = vrot.lane.b32.xlu0 %v454, 120
        %v475 = vpop.permute.xlu0 %474
        %476 = vrot.lane.b32.xlu0 %v459, 120
        %v477 = vpop.permute.xlu0 %476
        %478 = vrot.lane.b32.xlu0 %v464, 120
        %v479 = vpop.permute.xlu0 %478
        %v484 = vadd.f32 %v451, %v473
        %v485 = vadd.f32 %v456, %v475
        %v486 = vadd.f32 %v461, %v477
        %v487 = vadd.f32 %v466, %v479
        %vm488 = vcmask 64512
        %v489 = vsel %vm488, %v484, -inf
        %v490 = vsel %vm488, %v485, -inf
        %v491 = vsel %vm488, %v486, -inf
        %v492 = vsel %vm488, %v487, -inf
        %v493 = vmax.f32 %v489, %v490
        %v494 = vmax.f32 %v491, %v492
        %v495 = vmax.f32 %v493, %v494
        %v496 = vsub.f32 %v484, %v495
        %v497 = vsub.f32 %v485, %v495
        %v498 = vsub.f32 %v486, %v495
        %v499 = vsub.f32 %v487, %v495
        %v500 = vmul.f32 %v496, 1.442695
        %v501 = vpow.pop %v500
        %v502 = vmul.f32 %v497, 1.442695
        %v503 = vpow.pop %v502
        %v504 = vmul.f32 %v498, 1.442695
        %v505 = vpow.pop %v504
        %v506 = vmul.f32 %v499, 1.442695
        %v507 = vpow.pop %v506
        %v508 = vsel %vm488, %v501, 0.0
        %v509 = vsel %vm488, %v503, 0.0
        %v510 = vadd.f32 %v508, %v509
        %v511 = vsel %vm488, %v505, 0.0
        %v512 = vadd.f32 %v510, %v511
        %v513 = vsel %vm488, %v507, 0.0
        %v514 = vadd.f32 %v512, %v513
        %v515 = vrcp.pop %v514
        %v516 = vmul.f32 %v501, %v515
        %v517 = vmul.f32 %v503, %v515
        %v518 = vmul.f32 %v505, %v515
        %v519 = vmul.f32 %v507, %v515
        %v520 = vadd.f32 %v516, 1.0
        %v521 = vadd.f32 %v517, 1.0
        %v522 = vadd.f32 %v518, 1.0
        %v523 = vadd.f32 %v519, 1.0
        %v524 = vmul.f32 %v449, %v520
        %v525 = vmul.f32 %v454, %v521
        %v526 = vmul.f32 %v459, %v522
        %v527 = vmul.f32 %v464, %v523
        %528 = vxpose.xlu0.b32.start [1/16] %v524, 128
        %529 = vxpose.xlu0.b32.cont [2/16] 0.0, 128
        %530 = vxpose.xlu0.b32.cont [3/16] 0.0, 128
        %531 = vxpose.xlu0.b32.cont [4/16] 0.0, 128
        %532 = vxpose.xlu0.b32.cont [5/16] 0.0, 128
        %533 = vxpose.xlu0.b32.cont [6/16] 0.0, 128
        %534 = vxpose.xlu0.b32.cont [7/16] 0.0, 128
        %535 = vxpose.xlu0.b32.cont [8/16] 0.0, 128
        %536 = vxpose.xlu0.b32.cont [9/16] 0.0, 128
        %537 = vxpose.xlu0.b32.cont [10/16] 0.0, 128
        %538 = vxpose.xlu0.b32.cont [11/16] 0.0, 128
        %539 = vxpose.xlu0.b32.cont [12/16] 0.0, 128
        %540 = vxpose.xlu0.b32.cont [13/16] 0.0, 128
        %541 = vxpose.xlu0.b32.cont [14/16] 0.0, 128
        %542 = vxpose.xlu0.b32.cont [15/16] 0.0, 128
        %543 = vxpose.xlu0.b32.end [16/16] 0.0, 128
        %v544 = vpop.trf.xlu0
        %v545 = vpop.trf.xlu0
        %v546 = vpop.trf.xlu0
        %v547 = vpop.trf.xlu0
        %v548 = vpop.trf.xlu0
        %v549 = vpop.trf.xlu0
        %v550 = vpop.trf.xlu0
        %v551 = vpop.trf.xlu0
        %v552 = vpop.trf.xlu0
        %v553 = vpop.trf.xlu0
        %v554 = vpop.trf.xlu0
        %v555 = vpop.trf.xlu0
        %v556 = vpop.trf.xlu0
        %v557 = vpop.trf.xlu0
        %v558 = vpop.trf.xlu0
        %v559 = vpop.trf.xlu0
        %560 = vxpose.xlu0.b32.start [1/16] %v525, 128
        %561 = vxpose.xlu0.b32.cont [2/16] 0.0, 128
        %562 = vxpose.xlu0.b32.cont [3/16] 0.0, 128
        %563 = vxpose.xlu0.b32.cont [4/16] 0.0, 128
        %564 = vxpose.xlu0.b32.cont [5/16] 0.0, 128
        %565 = vxpose.xlu0.b32.cont [6/16] 0.0, 128
        %566 = vxpose.xlu0.b32.cont [7/16] 0.0, 128
        %567 = vxpose.xlu0.b32.cont [8/16] 0.0, 128
        %568 = vxpose.xlu0.b32.cont [9/16] 0.0, 128
        %569 = vxpose.xlu0.b32.cont [10/16] 0.0, 128
        %570 = vxpose.xlu0.b32.cont [11/16] 0.0, 128
        %571 = vxpose.xlu0.b32.cont [12/16] 0.0, 128
        %572 = vxpose.xlu0.b32.cont [13/16] 0.0, 128
        %573 = vxpose.xlu0.b32.cont [14/16] 0.0, 128
        %574 = vxpose.xlu0.b32.cont [15/16] 0.0, 128
        %575 = vxpose.xlu0.b32.end [16/16] 0.0, 128
        %v576 = vpop.trf.xlu0
        %v577 = vpop.trf.xlu0
        %v578 = vpop.trf.xlu0
        %v579 = vpop.trf.xlu0
        %v580 = vpop.trf.xlu0
        %v581 = vpop.trf.xlu0
        %v582 = vpop.trf.xlu0
        %v583 = vpop.trf.xlu0
        %v584 = vpop.trf.xlu0
        %v585 = vpop.trf.xlu0
        %v586 = vpop.trf.xlu0
        %v587 = vpop.trf.xlu0
        %v588 = vpop.trf.xlu0
        %v589 = vpop.trf.xlu0
        %v590 = vpop.trf.xlu0
        %v591 = vpop.trf.xlu0
        %592 = vxpose.xlu0.b32.start [1/16] %v526, 128
        %593 = vxpose.xlu0.b32.cont [2/16] 0.0, 128
        %594 = vxpose.xlu0.b32.cont [3/16] 0.0, 128
        %595 = vxpose.xlu0.b32.cont [4/16] 0.0, 128
        %596 = vxpose.xlu0.b32.cont [5/16] 0.0, 128
        %597 = vxpose.xlu0.b32.cont [6/16] 0.0, 128
        %598 = vxpose.xlu0.b32.cont [7/16] 0.0, 128
        %599 = vxpose.xlu0.b32.cont [8/16] 0.0, 128
        %600 = vxpose.xlu0.b32.cont [9/16] 0.0, 128
        %601 = vxpose.xlu0.b32.cont [10/16] 0.0, 128
        %602 = vxpose.xlu0.b32.cont [11/16] 0.0, 128
        %603 = vxpose.xlu0.b32.cont [12/16] 0.0, 128
        %604 = vxpose.xlu0.b32.cont [13/16] 0.0, 128
        %605 = vxpose.xlu0.b32.cont [14/16] 0.0, 128
        %606 = vxpose.xlu0.b32.cont [15/16] 0.0, 128
        %607 = vxpose.xlu0.b32.end [16/16] 0.0, 128
        %v608 = vpop.trf.xlu0
        %v609 = vpop.trf.xlu0
        %v610 = vpop.trf.xlu0
        %v611 = vpop.trf.xlu0
        %v612 = vpop.trf.xlu0
        %v613 = vpop.trf.xlu0
        %v614 = vpop.trf.xlu0
        %v615 = vpop.trf.xlu0
        %v616 = vpop.trf.xlu0
        %v617 = vpop.trf.xlu0
        %v618 = vpop.trf.xlu0
        %v619 = vpop.trf.xlu0
        %v620 = vpop.trf.xlu0
        %v621 = vpop.trf.xlu0
        %v622 = vpop.trf.xlu0
        %v623 = vpop.trf.xlu0
        %624 = vxpose.xlu0.b32.start [1/16] %v527, 128
        %625 = vxpose.xlu0.b32.cont [2/16] 0.0, 128
        %626 = vxpose.xlu0.b32.cont [3/16] 0.0, 128
        %627 = vxpose.xlu0.b32.cont [4/16] 0.0, 128
        %628 = vxpose.xlu0.b32.cont [5/16] 0.0, 128
        %629 = vxpose.xlu0.b32.cont [6/16] 0.0, 128
        %630 = vxpose.xlu0.b32.cont [7/16] 0.0, 128
        %631 = vxpose.xlu0.b32.cont [8/16] 0.0, 128
        %632 = vxpose.xlu0.b32.cont [9/16] 0.0, 128
        %633 = vxpose.xlu0.b32.cont [10/16] 0.0, 128
        %634 = vxpose.xlu0.b32.cont [11/16] 0.0, 128
        %635 = vxpose.xlu0.b32.cont [12/16] 0.0, 128
        %636 = vxpose.xlu0.b32.cont [13/16] 0.0, 128
        %637 = vxpose.xlu0.b32.cont [14/16] 0.0, 128
        %638 = vxpose.xlu0.b32.cont [15/16] 0.0, 128
        %639 = vxpose.xlu0.b32.end [16/16] 0.0, 128
        %v640 = vpop.trf.xlu0
        %v641 = vpop.trf.xlu0
        %v642 = vpop.trf.xlu0
        %v643 = vpop.trf.xlu0
        %v644 = vpop.trf.xlu0
        %v645 = vpop.trf.xlu0
        %v646 = vpop.trf.xlu0
        %v647 = vpop.trf.xlu0
        %v648 = vpop.trf.xlu0
        %v649 = vpop.trf.xlu0
        %v650 = vpop.trf.xlu0
        %v651 = vpop.trf.xlu0
        %v652 = vpop.trf.xlu0
        %v653 = vpop.trf.xlu0
        %v654 = vpop.trf.xlu0
        %v655 = vpop.trf.xlu0
        %656 = vst.msk [vmem:[%s223] sm:$0xff] %vm488, %v544
        %657 = vst.msk [vmem:[%s223 + $0x8] sm:$0xff] %vm488, %v576
        %658 = vst.msk [vmem:[%s223 + $0x10] sm:$0xff] %vm488, %v608
        %659 = vst.msk [vmem:[%s223 + $0x18] sm:$0xff] %vm488, %v640
        %s660 = sand.u32 %s97, 1
        %s661 = scalar_lea.sflag [#allocation4], %s660
        %s662 = sand.u32 %s97, 1
        %s663 = smul.addr %s662, 32
        %s664 = scalar_lea.vmem [#allocation8], %s663
        // Predicated region
        $region45: #{tpu_custom_call.1} parent=31 // pred_check
          %p665 = pneg %p107
        $region46: #{tpu_custom_call.1} parent=31 // pred_check_branch
          %667 = sbr.rel (%p665) target = $region48
        $region47: #{tpu_custom_call.1} parent=31 // pred_region
          %669 = vsyncadd %s661, 0
          %s670 = smul.addr %s21, 4
          %s671 = smul.addr %s670, 8
          %s672 = scalar_lea.hbm %s3, %s671
          %s673 = sshll.u32 %s664, 4
          %s674 = int_to_ptr.vmem [resolvable:$true] %s673
          %s675 = sshll.u32 %s672, 4
          %s676 = int_to_ptr.hbm [resolvable:$true] %s675
          %681 = dma.vmem_to_hbm [thread:$0]  %s674, 512, %s676, %s661, 128, 128, 8
        $region48: #{tpu_custom_call.1} parent=31 // pred_fallthru
          _
      $region32: #{tpu_custom_call.1} parent=5 // pred_fallthru
        _
      %p682 = scmp.le.s32.totalorder 2, %s16
      // Predicated region
      $region49: #{tpu_custom_call.1} parent=5 // pred_check
        %p683 = pneg %p682
      $region50: #{tpu_custom_call.1} parent=5 // pred_check_branch
        %685 = sbr.rel (%p683) target = $region52
      $region51: #{tpu_custom_call.1} parent=5 // pred_region
        %s686 = ssub.s32 %s16, 2
        // Predicated region
        $region53: #{tpu_custom_call.1} parent=51 // pred_check
          %p687 = pneg %p113
        $region54: #{tpu_custom_call.1} parent=51 // pred_check_branch
          %689 = sbr.rel (%p687) target = $region56
        $region55: #{tpu_custom_call.1} parent=51 // pred_region
          %s690 = sand.u32 %s98, 1
          %s691 = scalar_lea.sflag [#allocation4], %s690
          %s692 = sand.u32 %s98, 1
          %s693 = smul.addr %s692, 32
          %s694 = scalar_lea.vmem [#allocation8], %s693
          %696 = dma.done %s691, 512
        $region56: #{tpu_custom_call.1} parent=51 // pred_fallthru
          _
      $region52: #{tpu_custom_call.1} parent=5 // pred_fallthru
        _
    $region6: #{tpu_custom_call.1} parent=1 // loop_footer
      %s20 = sadd.s32 1, %s16
    $region7: #{tpu_custom_call.1} parent=1 // loop_footer_branch
      %15 = sbr.rel target = $region3
    $region8: #{tpu_custom_call.1} parent=1 // loop_exit
      _
    %697 = vsyncpa [#allocation3], 1
    %s698 = scalar_lea.sflag [#allocation3], 1
    %699 = vsyncpa %s698, 1
    %700 = vsyncpa [#allocation6], 1
    %701 = vsyncpa [#allocation4], 1
    %s702 = scalar_lea.sflag [#allocation4], 1
    %703 = vsyncpa %s702, 1

</llo_original>
